<compile_context>
chip_gen: v5e
topology: v5e:2x2
jax: 0.10.0
libtpu: 0.0.40
codegen_flags: <defaults>
</compile_context>

<pallas_src>
import functools

import jax
import jax.numpy as jnp
from jax.experimental import pallas as pl
from jax.experimental.pallas import tpu as pltpu

IN_F = 4
IN_PAD = 8     # layer-1 contraction dim zero-padded 4 -> 8 (sublane aligned)
HIDDEN = 64
OUT_F = 3
OUT_PAD = 8    # w2 rows padded 3 -> 8 for an aligned MXU op; only 3 rows stored


def mlp_kernel(xt_ref, w1_ref, b1_ref, w2_ref, b2_ref, o_ref):
    # xt_ref: (IN_PAD, TM)     batch on the lane axis -> lane-dense loads
    # w1_ref: (HIDDEN, IN_PAD) cols IN_F.. are zeros
    # b1_ref: (HIDDEN, 1)
    # w2_ref: (OUT_PAD, HIDDEN) rows OUT_F.. are zeros
    # b2_ref: (OUT_F, 1)
    # o_ref : (OUT_F, TM)      only the 3 real output rows are written back
    # Layer 1 on the MXU, f32 accumulation.
    h = jnp.dot(w1_ref[...], xt_ref[...], preferred_element_type=jnp.float32)
    h = jnp.maximum(h + b1_ref[...], 0.0)          # clamp(min=0)
    # sigmoid as a single transcendental: sigmoid(x) = 0.5*tanh(0.5*x) + 0.5
    s = 0.5 * jnp.tanh(0.5 * h) + 0.5
    # Layer 2 on the MXU: (8, 64) @ (64, TM); keep only the 3 real rows.
    y = jnp.dot(w2_ref[...], s, preferred_element_type=jnp.float32)
    o_ref[...] = (y[:OUT_F, :] + b2_ref[...]).astype(o_ref.dtype)


def _round_up(n, m):
    return ((n + m - 1) // m) * m


def _prep_params(w1, b1, w2, b2):
    w1p = jnp.zeros((HIDDEN, IN_PAD), jnp.float32).at[:, :IN_F].set(w1)
    b1c = b1.reshape(HIDDEN, 1).astype(jnp.float32)
    w2p = jnp.zeros((OUT_PAD, HIDDEN), jnp.float32).at[:OUT_F, :].set(w2)
    b2c = b2.reshape(OUT_F, 1).astype(jnp.float32)
    return w1p, b1c, w2p, b2c


def _mlp_call(xtp, w1p, b1c, w2p, b2c, tm):
    b_pad = xtp.shape[1]
    grid = (b_pad // tm,)
    return pl.pallas_call(
        mlp_kernel,
        out_shape=jax.ShapeDtypeStruct((OUT_F, b_pad), jnp.float32),
        grid=grid,
        in_specs=[
            pl.BlockSpec((IN_PAD, tm), lambda i: (0, i)),       # pipelined x tile
            pl.BlockSpec((HIDDEN, IN_PAD), lambda i: (0, 0)),   # weights fetched once,
            pl.BlockSpec((HIDDEN, 1), lambda i: (0, 0)),        # stay resident
            pl.BlockSpec((OUT_PAD, HIDDEN), lambda i: (0, 0)),
            pl.BlockSpec((OUT_F, 1), lambda i: (0, 0)),
        ],
        out_specs=pl.BlockSpec((OUT_F, tm), lambda i: (0, i)),  # 3 rows, lane-dense
        compiler_params=pltpu.CompilerParams(
            dimension_semantics=("parallel",)),                 # megacore on v7x
    )(xtp, w1p, b1c, w2p, b2c)


def _forward_feature_major(xt, w1, b1, w2, b2, tile_m):
    """xt: (IN_F, B) feature-major input; returns (OUT_F, B)."""
    assert tile_m % 128 == 0, "tile_m must be a multiple of 128 (lane tiling)"
    B = xt.shape[1]
    tm = min(tile_m, _round_up(B, 128))       # shrink tile for small batches
    b_pad = _round_up(B, tm)
    # Zero-pad the contraction dim to 8 rows and the batch to a tile multiple.
    xtp = jnp.zeros((IN_PAD, b_pad), jnp.float32).at[:IN_F, :B].set(xt)
    w1p, b1c, w2p, b2c = _prep_params(w1, b1, w2, b2)
    yt = _mlp_call(xtp, w1p, b1c, w2p, b2c, tm)
    return yt[:, :B]


@functools.partial(jax.jit, static_argnames=("tile_m",))
def two_layer_net_feature_major(xt, w1, b1, w2, b2, tile_m=8192):
    """Fast path: x supplied feature-major as (4, B); returns (3, B)."""
    return _forward_feature_major(xt, w1, b1, w2, b2, tile_m)


@functools.partial(jax.jit, static_argnames=("tile_m",))
def two_layer_net(x, w1, b1, w2, b2, tile_m=8192):
    """PyTorch-layout interface: x (B, 4) -> (B, 3) (PyTorch weight layouts)."""
    return _forward_feature_major(x.T, w1, b1, w2, b2, tile_m).T


def init_params(key):
    """Deterministic init mimicking nn.Linear's U(-1/sqrt(fan_in), +1/sqrt(fan_in)),
    stored in PyTorch's (out_features, in_features) layout."""
    k1, k2, k3, k4 = jax.random.split(key, 4)
    bound1 = 1.0 / (IN_F ** 0.5)
    bound2 = 1.0 / (HIDDEN ** 0.5)
    w1 = jax.random.uniform(k1, (HIDDEN, IN_F), jnp.float32, -bound1, bound1)
    b1 = jax.random.uniform(k2, (HIDDEN,), jnp.float32, -bound1, bound1)
    w2 = jax.random.uniform(k3, (OUT_F, HIDDEN), jnp.float32, -bound2, bound2)
    b2 = jax.random.uniform(k4, (OUT_F,), jnp.float32, -bound2, bound2)
    return w1, b1, w2, b2


def reference(x, w1, b1, w2, b2):
    h = jnp.maximum(x @ w1.T + b1, 0.0)
    h = jax.nn.sigmoid(h)
    return h @ w2.T + b2


if __name__ == "__main__":
    key = jax.random.PRNGKey(0)
    kx, kp = jax.random.split(key)
    batch = 8
    x = jax.random.normal(kx, (batch, IN_F), jnp.float32)
    w1, b1, w2, b2 = init_params(kp)

    y = two_layer_net(x, w1, b1, w2, b2)
    y = jax.block_until_ready(y)
    y_ref = reference(x, w1, b1, w2, b2)
    assert y.shape == (batch, OUT_F)
    assert jnp.allclose(y, y_ref, atol=1e-5, rtol=1e-5), float(jnp.abs(y - y_ref).max())

    # Feature-major fast path (no batch-sized transpose passes in the wrapper).
    yt = two_layer_net_feature_major(x.T, w1, b1, w2, b2)
    yt = jax.block_until_ready(yt)
    assert yt.shape == (OUT_F, batch)
    assert jnp.allclose(yt.T, y_ref, atol=1e-5, rtol=1e-5)

    print("KERNEL_OK")
</pallas_src>

<mosaic_0001>
module attributes {stable_mosaic.version = 11 : i64} {
  func.func @mlp_kernel(%arg0: i32, %arg1: memref<8x128xf32, #tpu.memory_space<vmem>>, %arg2: memref<64x8xf32, #tpu.memory_space<vmem>>, %arg3: memref<64x1xf32, #tpu.memory_space<vmem>>, %arg4: memref<8x64xf32, #tpu.memory_space<vmem>>, %arg5: memref<3x1xf32, #tpu.memory_space<vmem>>, %arg6: memref<3x128xf32, #tpu.memory_space<vmem>>) attributes {dimension_semantics = [#tpu.dimension_semantics<parallel>], iteration_bounds = array<i64: 1>, scalar_prefetch = 0 : i64, scratch_operands = 0 : i64, tpu.core_type = #tpu.core_type<tc>, window_params = [{transform_indices = @transform_0, window_bounds = array<i64: 8, 128>}, {pipeline_mode = #tpu.pipeline_mode<synchronous>, transform_indices = @transform_1, window_bounds = array<i64: 64, 8>}, {pipeline_mode = #tpu.pipeline_mode<synchronous>, transform_indices = @transform_2, window_bounds = array<i64: 64, 1>}, {pipeline_mode = #tpu.pipeline_mode<synchronous>, transform_indices = @transform_3, window_bounds = array<i64: 8, 64>}, {pipeline_mode = #tpu.pipeline_mode<synchronous>, transform_indices = @transform_4, window_bounds = array<i64: 3, 1>}, {transform_indices = @transform_5, window_bounds = array<i64: 3, 128>}]} {
    %c0 = arith.constant 0 : index
    %c0_0 = arith.constant 0 : index
    %0 = vector.load %arg2[%c0, %c0_0] : memref<64x8xf32, #tpu.memory_space<vmem>>, vector<64x8xf32>
    %c0_1 = arith.constant 0 : index
    %c0_2 = arith.constant 0 : index
    %1 = vector.load %arg1[%c0_1, %c0_2] : memref<8x128xf32, #tpu.memory_space<vmem>>, vector<8x128xf32>
    %cst = arith.constant dense<0.000000e+00> : vector<64x128xf32>
    %2 = tpu.matmul %0, %1, %cst {dimension_numbers = #tpu.dot_dimension_numbers<[1], [0], [0], [1], [0, 0, 1, 1], [], []>} : vector<64x8xf32>, vector<8x128xf32>, vector<64x128xf32> -> vector<64x128xf32>
    %c0_3 = arith.constant 0 : index
    %c0_4 = arith.constant 0 : index
    %3 = vector.load %arg3[%c0_3, %c0_4] : memref<64x1xf32, #tpu.memory_space<vmem>>, vector<64x1xf32>
    %4 = vector.broadcast %3 : vector<64x1xf32> to vector<64x128xf32>
    %5 = arith.addf %2, %4 : vector<64x128xf32>
    %cst_5 = arith.constant 0.000000e+00 : f32
    %6 = vector.broadcast %cst_5 : f32 to vector<64x128xf32>
    %7 = arith.maximumf %5, %6 : vector<64x128xf32>
    %cst_6 = arith.constant 5.000000e-01 : f32
    %8 = vector.broadcast %cst_6 : f32 to vector<64x128xf32>
    %9 = arith.mulf %8, %7 : vector<64x128xf32>
    %10 = math.tanh %9 : vector<64x128xf32>
    %cst_7 = arith.constant 5.000000e-01 : f32
    %11 = vector.broadcast %cst_7 : f32 to vector<64x128xf32>
    %12 = arith.mulf %11, %10 : vector<64x128xf32>
    %cst_8 = arith.constant 5.000000e-01 : f32
    %13 = vector.broadcast %cst_8 : f32 to vector<64x128xf32>
    %14 = arith.addf %12, %13 : vector<64x128xf32>
    %c0_9 = arith.constant 0 : index
    %c0_10 = arith.constant 0 : index
    %15 = vector.load %arg4[%c0_9, %c0_10] : memref<8x64xf32, #tpu.memory_space<vmem>>, vector<8x64xf32>
    %cst_11 = arith.constant dense<0.000000e+00> : vector<8x128xf32>
    %16 = tpu.matmul %15, %14, %cst_11 {dimension_numbers = #tpu.dot_dimension_numbers<[1], [0], [0], [1], [0, 0, 1, 1], [], []>} : vector<8x64xf32>, vector<64x128xf32>, vector<8x128xf32> -> vector<8x128xf32>
    %17 = vector.extract_strided_slice %16 {offsets = [0, 0], sizes = [3, 128], strides = [1, 1]} : vector<8x128xf32> to vector<3x128xf32>
    %c0_12 = arith.constant 0 : index
    %c0_13 = arith.constant 0 : index
    %18 = vector.load %arg5[%c0_12, %c0_13] : memref<3x1xf32, #tpu.memory_space<vmem>>, vector<3x1xf32>
    %19 = vector.broadcast %18 : vector<3x1xf32> to vector<3x128xf32>
    %20 = arith.addf %17, %19 : vector<3x128xf32>
    %c0_14 = arith.constant 0 : index
    %c0_15 = arith.constant 0 : index
    %21 = vector.load %arg6[%c0_14, %c0_15] : memref<3x128xf32, #tpu.memory_space<vmem>>, vector<3x128xf32>
    tpu.vector_store %arg6[%c0_14, %c0_15], %20 {strides = array<i32>} : memref<3x128xf32, #tpu.memory_space<vmem>>, vector<3x128xf32>,
    return
  }
  func.func @transform_0(%arg0: i32) -> (i32, i32) {
    %c0_i32 = arith.constant 0 : i32
    %c0_i32_0 = arith.constant 0 : i32
    return %c0_i32, %arg0 : i32, i32
  }
  func.func @transform_1(%arg0: i32) -> (i32, i32) {
    %c0_i32 = arith.constant 0 : i32
    %c0_i32_0 = arith.constant 0 : i32
    %c0_i32_1 = arith.constant 0 : i32
    return %c0_i32, %c0_i32_0 : i32, i32
  }
  func.func @transform_2(%arg0: i32) -> (i32, i32) {
    %c0_i32 = arith.constant 0 : i32
    %c0_i32_0 = arith.constant 0 : i32
    %c0_i32_1 = arith.constant 0 : i32
    return %c0_i32, %c0_i32_0 : i32, i32
  }
  func.func @transform_3(%arg0: i32) -> (i32, i32) {
    %c0_i32 = arith.constant 0 : i32
    %c0_i32_0 = arith.constant 0 : i32
    %c0_i32_1 = arith.constant 0 : i32
    return %c0_i32, %c0_i32_0 : i32, i32
  }
  func.func @transform_4(%arg0: i32) -> (i32, i32) {
    %c0_i32 = arith.constant 0 : i32
    %c0_i32_0 = arith.constant 0 : i32
    %c0_i32_1 = arith.constant 0 : i32
    return %c0_i32, %c0_i32_0 : i32, i32
  }
  func.func @transform_5(%arg0: i32) -> (i32, i32) {
    %c0_i32 = arith.constant 0 : i32
    %c0_i32_0 = arith.constant 0 : i32
    return %c0_i32, %arg0 : i32, i32
  }
}

</mosaic_0001>

<llo_original>
// kernel: two_layer_net.1
$region0: #{two_layer_net.1}
  #allocation0 [shape = 'u32[]', space=smem, size = 0x4, offset = 0x4, fixed_abs, tag = 'smem constant byte address 0x4 - core index']
  #allocation1 [shape = 'u32[72,128]{1,0:T(1,128)}', space=vmem, size = 0x9000, scoped, tag = 'internal scratch']
  %s0 = inlined_call_operand.vmem [shape: f32[8,128], index: 0, kind: input, shape index: {}]
  %s1 = inlined_call_operand.vmem [shape: f32[64,8], index: 1, kind: input, shape index: {}]
  %s2 = inlined_call_operand.vmem [shape: f32[64,1], index: 2, kind: input, shape index: {}]
  %s3 = inlined_call_operand.vmem [shape: f32[8,64], index: 3, kind: input, shape index: {}]
  %s4 = inlined_call_operand.vmem [shape: f32[3,1], index: 4, kind: input, shape index: {}]
  %s5 = inlined_call_operand.vmem [shape: f32[3,128], index: 5, kind: output, shape index: {}]
  %s6 = sld [smem:[#allocation0]]
  $region30: #{two_layer_net.1} parent=0
    _
  %s8 = ssub.s32 1, %s6
  %s9 = scalar_select 0, %s8, %s6
  // Predicated region
  $region2: #{two_layer_net.1} parent=0 // pred_check
    _
  $region3: #{two_layer_net.1} parent=0 // pred_check_branch
    %11 = sbr.rel (0) target = $region5
  $region4: #{two_layer_net.1} parent=0 // pred_region
    _
  $region5: #{two_layer_net.1} parent=0 // pred_fallthru
    _
  // Predicated region
  $region6: #{two_layer_net.1} parent=0 // pred_check
    _
  $region7: #{two_layer_net.1} parent=0 // pred_check_branch
    %13 = sbr.rel (0) target = $region9
  $region8: #{two_layer_net.1} parent=0 // pred_region
    _
  $region9: #{two_layer_net.1} parent=0 // pred_fallthru
    _
  // Predicated region
  $region10: #{two_layer_net.1} parent=0 // pred_check
    _
  $region11: #{two_layer_net.1} parent=0 // pred_check_branch
    %15 = sbr.rel (0) target = $region13
  $region12: #{two_layer_net.1} parent=0 // pred_region
    _
  $region13: #{two_layer_net.1} parent=0 // pred_fallthru
    _
  // Predicated region
  $region14: #{two_layer_net.1} parent=0 // pred_check
    _
  $region15: #{two_layer_net.1} parent=0 // pred_check_branch
    %17 = sbr.rel (0) target = $region17
  $region16: #{two_layer_net.1} parent=0 // pred_region
    _
  $region17: #{two_layer_net.1} parent=0 // pred_fallthru
    _
  // Predicated region
  $region18: #{two_layer_net.1} parent=0 // pred_check
    _
  $region19: #{two_layer_net.1} parent=0 // pred_check_branch
    %19 = sbr.rel (0) target = $region21
  $region20: #{two_layer_net.1} parent=0 // pred_region
    _
  $region21: #{two_layer_net.1} parent=0 // pred_fallthru
    _
  %v20 = vld [vmem:[%s1] sm:$0xff]
  %v21 = vld [vmem:[%s1 + $0x8] sm:$0xff]
  %v22 = vld [vmem:[%s1 + $0x10] sm:$0xff]
  %v23 = vld [vmem:[%s1 + $0x18] sm:$0xff]
  %v24 = vld [vmem:[%s1 + $0x20] sm:$0xff]
  %v25 = vld [vmem:[%s1 + $0x28] sm:$0xff]
  %v26 = vld [vmem:[%s1 + $0x30] sm:$0xff]
  %v27 = vld [vmem:[%s1 + $0x38] sm:$0xff]
  %v28 = vld [vmem:[%s0] sm:$0xff]
  %v29 = vld [vmem:[%s2] sm:$0xff]
  %v30 = vld [vmem:[%s2 + $0x8] sm:$0xff]
  %v31 = vld [vmem:[%s2 + $0x10] sm:$0xff]
  %v32 = vld [vmem:[%s2 + $0x18] sm:$0xff]
  %v33 = vld [vmem:[%s2 + $0x20] sm:$0xff]
  %v34 = vld [vmem:[%s2 + $0x28] sm:$0xff]
  %v35 = vld [vmem:[%s2 + $0x30] sm:$0xff]
  %v36 = vld [vmem:[%s2 + $0x38] sm:$0xff]
  %38 = vset.pattern.permute.xlu0 0
  %39 = vperm.xlu0 %38, %v29
  %v40 = vpop.permute.xlu0 %39
  %43 = vset.pattern.permute.xlu0 0
  %44 = vperm.xlu0 %43, %v30
  %v45 = vpop.permute.xlu0 %44
  %48 = vset.pattern.permute.xlu0 0
  %49 = vperm.xlu0 %48, %v31
  %v50 = vpop.permute.xlu0 %49
  %53 = vset.pattern.permute.xlu0 0
  %54 = vperm.xlu0 %53, %v32
  %v55 = vpop.permute.xlu0 %54
  %58 = vset.pattern.permute.xlu0 0
  %59 = vperm.xlu0 %58, %v33
  %v60 = vpop.permute.xlu0 %59
  %63 = vset.pattern.permute.xlu0 0
  %64 = vperm.xlu0 %63, %v34
  %v65 = vpop.permute.xlu0 %64
  %68 = vset.pattern.permute.xlu0 0
  %69 = vperm.xlu0 %68, %v35
  %v70 = vpop.permute.xlu0 %69
  %73 = vset.pattern.permute.xlu0 0
  %74 = vperm.xlu0 %73, %v36
  %v75 = vpop.permute.xlu0 %74
  %vm77 = vcmask 64512
  %v79 = vsel %vm77, %v20, 0
  %v82 = vsel %vm77, %v21, 0
  %v85 = vsel %vm77, %v22, 0
  %v88 = vsel %vm77, %v23, 0
  %v91 = vsel %vm77, %v24, 0
  %v94 = vsel %vm77, %v25, 0
  %v97 = vsel %vm77, %v26, 0
  %v100 = vsel %vm77, %v27, 0
  %102 = vmatpush.msra.mxu0 0.0
  %103 = vmatpush.msra.mxu0 0.0
  %104 = vmatpush.msra.mxu0 0.0
  %105 = vmatpush.msra.mxu0 0.0
  %106 = vmatpush.msra.mxu0 0.0
  %107 = vmatpush.msra.mxu0 0.0
  %108 = vmatpush.msra.mxu0 0.0
  %109 = vmatpush.msra.mxu0 0.0
  %110 = vmatpush.msra.mxu0 0.0
  %111 = vmatpush.msra.mxu0 0.0
  %112 = vmatpush.msra.mxu0 0.0
  %113 = vmatpush.msra.mxu0 0.0
  %114 = vmatpush.msra.mxu0 0.0
  %115 = vmatpush.msra.mxu0 0.0
  %116 = vmatpush.msra.mxu0 0.0
  %117 = vmatpush.msra.mxu0 %v28
  %118 = vmatmul.f32.gmra.mxu0 %v79
  %v119 = vpop.f32.mrf.mxu0
  %v120 = vadd.f32 %v40, %v119
  %121 = vmatmul.f32.gmra.mxu0 %v82
  %v122 = vpop.f32.mrf.mxu0
  %v123 = vadd.f32 %v45, %v122
  %124 = vmatmul.f32.gmra.mxu0 %v85
  %v125 = vpop.f32.mrf.mxu0
  %v126 = vadd.f32 %v50, %v125
  %127 = vmatmul.f32.gmra.mxu0 %v88
  %v128 = vpop.f32.mrf.mxu0
  %v129 = vadd.f32 %v55, %v128
  %130 = vmatmul.f32.gmra.mxu0 %v91
  %v131 = vpop.f32.mrf.mxu0
  %v132 = vadd.f32 %v60, %v131
  %133 = vmatmul.f32.gmra.mxu0 %v94
  %v134 = vpop.f32.mrf.mxu0
  %v135 = vadd.f32 %v65, %v134
  %136 = vmatmul.f32.gmra.mxu0 %v97
  %v137 = vpop.f32.mrf.mxu0
  %v138 = vadd.f32 %v70, %v137
  %139 = vmatmul.f32.gmra.mxu0 %v100
  %v140 = vpop.f32.mrf.mxu0
  %v141 = vadd.f32 %v75, %v140
  %142 = vdwg.mxu0
  %v143 = vmax.f32 %v120, 0.0
  %v144 = vmax.f32 %v123, 0.0
  %v145 = vmax.f32 %v126, 0.0
  %v146 = vmax.f32 %v129, 0.0
  %v147 = vmax.f32 %v132, 0.0
  %v148 = vmax.f32 %v135, 0.0
  %v149 = vmax.f32 %v138, 0.0
  %v150 = vmax.f32 %v141, 0.0
  %v151 = vmul.f32 %v143, 0.5
  %v152 = vmul.f32 %v144, 0.5
  %v153 = vmul.f32 %v145, 0.5
  %v154 = vmul.f32 %v146, 0.5
  %v155 = vmul.f32 %v147, 0.5
  %v156 = vmul.f32 %v148, 0.5
  %v157 = vmul.f32 %v149, 0.5
  %v158 = vmul.f32 %v150, 0.5
  %v159 = vtanh.pop %v151
  %v160 = vtanh.pop %v152
  %v161 = vtanh.pop %v153
  %v162 = vtanh.pop %v154
  %v163 = vtanh.pop %v155
  %v164 = vtanh.pop %v156
  %v165 = vtanh.pop %v157
  %v166 = vtanh.pop %v158
  %v167 = vmul.f32 %v159, 0.5
  %v168 = vmul.f32 %v160, 0.5
  %v169 = vmul.f32 %v161, 0.5
  %v170 = vmul.f32 %v162, 0.5
  %v171 = vmul.f32 %v163, 0.5
  %v172 = vmul.f32 %v164, 0.5
  %v173 = vmul.f32 %v165, 0.5
  %v174 = vmul.f32 %v166, 0.5
  %v175 = vadd.f32 %v167, 0.5
  %v176 = vadd.f32 %v168, 0.5
  %v177 = vadd.f32 %v169, 0.5
  %v178 = vadd.f32 %v170, 0.5
  %v179 = vadd.f32 %v171, 0.5
  %v180 = vadd.f32 %v172, 0.5
  %v181 = vadd.f32 %v173, 0.5
  %v182 = vadd.f32 %v174, 0.5
  %v183 = vld [vmem:[%s3] sm:$0xff]
  %vm184 = vcmask 523264
  %v186 = vsel %vm184, %v183, 0
  %188 = vmatpush.msra.mxu0 0.0
  %189 = vmatpush.msra.mxu0 0.0
  %190 = vmatpush.msra.mxu0 0.0
  %191 = vmatpush.msra.mxu0 0.0
  %192 = vmatpush.msra.mxu0 0.0
  %193 = vmatpush.msra.mxu0 0.0
  %194 = vmatpush.msra.mxu0 0.0
  %195 = vmatpush.msra.mxu0 0.0
  %196 = vmatpush.msra.mxu0 %v182
  %197 = vmatpush.msra.mxu0 %v181
  %198 = vmatpush.msra.mxu0 %v180
  %199 = vmatpush.msra.mxu0 %v179
  %200 = vmatpush.msra.mxu0 %v178
  %201 = vmatpush.msra.mxu0 %v177
  %202 = vmatpush.msra.mxu0 %v176
  %203 = vmatpush.msra.mxu0 %v175
  %204 = vmatmul.f32.gmra.mxu0 %v186
  %v205 = vpop.f32.mrf.mxu0
  %v206 = vadd.f32 0.0, %v205
  %207 = vdwg.mxu0
  %v208 = vld [vmem:[%s4] sm:$0x7]
  %210 = vset.pattern.permute.xlu0 0
  %211 = vperm.xlu0 %210, %v208
  %v212 = vpop.permute.xlu0 %211
  %v214 = vadd.f32 %v206, %v212
  %215 = vst [vmem:[%s5] sm:$0x7] %v214
  // Predicated region
  $region22: #{two_layer_net.1} parent=0 // pred_check
    _
  $region23: #{two_layer_net.1} parent=0 // pred_check_branch
    %217 = sbr.rel (0) target = $region25
  $region24: #{two_layer_net.1} parent=0 // pred_region
    _
  $region25: #{two_layer_net.1} parent=0 // pred_fallthru
    _
  // Predicated region
  $region26: #{two_layer_net.1} parent=0 // pred_check
    _
  $region27: #{two_layer_net.1} parent=0 // pred_check_branch
    %219 = sbr.rel (0) target = $region29
  $region28: #{two_layer_net.1} parent=0 // pred_region
    _
  $region29: #{two_layer_net.1} parent=0 // pred_fallthru
    _

</llo_original>
